<compile_context>
chip_gen: v5e
topology: v5e:2x2
jax: 0.10.0
libtpu: 0.0.40
codegen_flags: <defaults>
</compile_context>

<pallas_src>
import jax
import jax.numpy as jnp
from jax.experimental import pallas as pl
from jax.experimental.pallas import tpu as pltpu


def _round_up(x, m):
    return ((x + m - 1) // m) * m


# ---------------------------------------------------------------------------
# Kernels
# ---------------------------------------------------------------------------
def _mm_oneshot_kernel(w_ref, x_ref, o_ref):
    # Whole (or full-K) problem resident in VMEM: one MXU pass, f32 accum.
    o_ref[...] = jnp.dot(
        w_ref[...], x_ref[...], preferred_element_type=jnp.float32
    ).astype(o_ref.dtype)


def _mm_tiled_f32_kernel(w_ref, x_ref, o_ref):
    # f32 output: the output block is resident across the k axis, accumulate
    # straight into it (no scratch, no extra copy).
    @pl.when(pl.program_id(2) == 0)
    def _():
        o_ref[...] = jnp.zeros_like(o_ref)

    o_ref[...] += jnp.dot(
        w_ref[...], x_ref[...], preferred_element_type=jnp.float32
    )


def _mm_tiled_acc_kernel(w_ref, x_ref, o_ref, acc_ref):
    # Non-f32 output: accumulate in an f32 VMEM scratch, cast once at the end.
    @pl.when(pl.program_id(2) == 0)
    def _():
        acc_ref[...] = jnp.zeros_like(acc_ref)

    acc_ref[...] += jnp.dot(
        w_ref[...], x_ref[...], preferred_element_type=jnp.float32
    )

    @pl.when(pl.program_id(2) == pl.num_programs(2) - 1)
    def _():
        o_ref[...] = acc_ref[...].astype(o_ref.dtype)


# ---------------------------------------------------------------------------
# Wrapper
# ---------------------------------------------------------------------------
def pallas_matmul(
    w,
    x,
    *,
    tm=512,
    tn=1024,
    tk=512,
    single_block_bytes=8 * 1024 * 1024,
    w_resident_bytes=4 * 1024 * 1024,
    cast_to_bf16=False,
):
    """w @ x via Pallas TPU kernels.  Arbitrary (non-aligned) shapes OK."""
    M, K = w.shape
    K2, N = x.shape
    assert K == K2, "inner dims must match"
    out_dtype = jnp.result_type(w.dtype, x.dtype)

    if cast_to_bf16:
        # Optional precision trade-off: bf16 operands, f32 accumulation.
        w = w.astype(jnp.bfloat16)
        x = x.astype(jnp.bfloat16)
    if w.dtype != x.dtype:
        common = jnp.result_type(w.dtype, x.dtype)
        w, x = w.astype(common), x.astype(common)

    itemsize = jnp.dtype(w.dtype).itemsize
    out_itemsize = jnp.dtype(out_dtype).itemsize
    flops = 2 * M * N * K

    # ---- Path 1: tiny / latency-bound problem — one block, no grid ----------
    total_bytes = itemsize * (M * K + K * N) + out_itemsize * M * N
    if total_bytes <= single_block_bytes:
        cost = pl.CostEstimate(
            flops=flops, transcendentals=0, bytes_accessed=total_bytes
        )
        return pl.pallas_call(
            _mm_oneshot_kernel,
            out_shape=jax.ShapeDtypeStruct((M, N), out_dtype),
            cost_estimate=cost,
        )(w, x)

    # ---- Path 2: w fully VMEM-resident, 1-D grid streaming x/out over N -----
    w_bytes = itemsize * M * K
    if w_bytes <= w_resident_bytes:
        tn_r = tn if N > tn else N  # full extent when it fits (no alignment pad)
        vmem_est = (
            w_bytes + 2 * itemsize * K * tn_r + 2 * out_itemsize * M * tn_r
        )
        if vmem_est <= 24 * 1024 * 1024:
            grid_j = pl.cdiv(N, tn_r)
            cost = pl.CostEstimate(
                flops=flops,
                transcendentals=0,
                bytes_accessed=itemsize * (M * K + K * N) + out_itemsize * M * N,
            )
            return pl.pallas_call(
                _mm_oneshot_kernel,
                out_shape=jax.ShapeDtypeStruct((M, N), out_dtype),
                grid_spec=pltpu.PrefetchScalarGridSpec(
                    num_scalar_prefetch=0,
                    grid=(grid_j,),
                    in_specs=[
                        pl.BlockSpec((M, K), lambda j: (0, 0)),     # resident
                        pl.BlockSpec((K, tn_r), lambda j: (0, j)),  # streamed
                    ],
                    out_specs=pl.BlockSpec((M, tn_r), lambda j: (0, j)),
                ),
                compiler_params=pltpu.CompilerParams(
                    dimension_semantics=("parallel",),
                    vmem_limit_bytes=min(
                        vmem_est + 8 * 1024 * 1024, 64 * 1024 * 1024
                    ),
                ),
                cost_estimate=cost,
            )(w, x)

    # ---- Path 3: 3-D tiled matmul (large shapes) -----------------------------
    # Clamp each tile to the full extent when the dim already fits (no padding
    # needed: a full-extent block is always legal regardless of alignment).
    tm3 = tm if M > tm else M
    tn3 = tn if N > tn else N
    tk3 = tk if K > tk else K

    # Megacore (v7x): keep at least 2 steps on a "parallel" axis when possible.
    if pl.cdiv(M, tm3) == 1 and pl.cdiv(N, tn3) == 1 and N >= 256:
        tn3 = _round_up(pl.cdiv(N, 2), 128)

    # Only the reduction axis requires zero padding for correctness; boundary
    # blocks on M/N are handled by masked (discarded) out-of-bounds writes.
    if K % tk3 != 0:
        K_eff = _round_up(K, tk3)
        w = jnp.pad(w, ((0, 0), (0, K_eff - K)))
        x = jnp.pad(x, ((0, K_eff - K), (0, 0)))
    else:
        K_eff = K

    grid = (pl.cdiv(M, tm3), pl.cdiv(N, tn3), K_eff // tk3)
    acc_in_out = out_dtype == jnp.float32

    vmem_est = (
        2 * itemsize * (tm3 * tk3 + tk3 * tn3)
        + 2 * out_itemsize * tm3 * tn3
        + (0 if acc_in_out else 4 * tm3 * tn3)
    )
    # Truthful traffic estimate: w re-read per N-tile, x re-read per M-tile.
    cost = pl.CostEstimate(
        flops=flops,
        transcendentals=0,
        bytes_accessed=itemsize * (M * K_eff * grid[1] + K_eff * N * grid[0])
        + out_itemsize * M * N,
    )

    kernel = _mm_tiled_f32_kernel if acc_in_out else _mm_tiled_acc_kernel
    scratch = [] if acc_in_out else [pltpu.VMEM((tm3, tn3), jnp.float32)]

    return pl.pallas_call(
        kernel,
        out_shape=jax.ShapeDtypeStruct((M, N), out_dtype),
        grid_spec=pltpu.PrefetchScalarGridSpec(
            num_scalar_prefetch=0,
            grid=grid,
            in_specs=[
                pl.BlockSpec((tm3, tk3), lambda i, j, k: (i, k)),
                pl.BlockSpec((tk3, tn3), lambda i, j, k: (k, j)),
            ],
            out_specs=pl.BlockSpec((tm3, tn3), lambda i, j, k: (i, j)),
            scratch_shapes=scratch,
        ),
        compiler_params=pltpu.CompilerParams(
            dimension_semantics=("parallel", "parallel", "arbitrary"),
            # Always set explicitly: v5e's scoped default is only 16 MiB.
            vmem_limit_bytes=min(vmem_est + 8 * 1024 * 1024, 64 * 1024 * 1024),
        ),
        cost_estimate=cost,
    )(w, x)


def radar_base_forward(w, r, x):
    """Equivalent of RadarBase.forward: returns (w @ x, r)."""
    return pallas_matmul(w, x), r


# ---------------------------------------------------------------------------
# Self-test
# ---------------------------------------------------------------------------
if __name__ == "__main__":
    key = jax.random.PRNGKey(0)
    k_w, k_r, k_x, k_w2, k_x2, k_w3, k_x3 = jax.random.split(key, 7)

    # Small shapes consistent with RadarBase (w: (M,K) param, x: (K,N) input,
    # r: extra param passed through).  Intentionally not (8,128)-aligned.
    M, K, N = 48, 96, 64
    w = jax.random.normal(k_w, (M, K), dtype=jnp.float32)
    r = jax.random.normal(k_r, (M, N), dtype=jnp.float32)
    x = jax.random.normal(k_x, (K, N), dtype=jnp.float32)

    out, r_out = radar_base_forward(w, r, x)  # single-block fast path
    jax.block_until_ready(out)
    jax.block_until_ready(r_out)
    assert jnp.allclose(out, w @ x, atol=1e-4, rtol=1e-4), "matmul mismatch"
    assert (r_out == r).all(), "r should be passed through unchanged"

    # w-resident 1-D path with a partial boundary block on N (masked writes).
    M2, K2, N2 = 48, 96, 200
    w2 = jax.random.normal(k_w2, (M2, K2), dtype=jnp.float32)
    x2 = jax.random.normal(k_x2, (K2, N2), dtype=jnp.float32)
    out2 = pallas_matmul(w2, x2, tn=128, single_block_bytes=0)
    jax.block_until_ready(out2)
    assert jnp.allclose(out2, w2 @ x2, atol=1e-3, rtol=1e-3), "w-resident mismatch"

    # 3-D tiled path (forced), exercising K zero-padding (448 -> 512).
    M3, K3, N3 = 384, 448, 640
    w3 = jax.random.normal(k_w3, (M3, K3), dtype=jnp.float32)
    x3 = jax.random.normal(k_x3, (K3, N3), dtype=jnp.float32)
    out3 = pallas_matmul(
        w3, x3, tm=128, tn=128, tk=128,
        single_block_bytes=0, w_resident_bytes=0,
    )
    jax.block_until_ready(out3)
    assert jnp.allclose(out3, w3 @ x3, atol=1e-3, rtol=1e-3), "tiled mismatch"

    print("KERNEL_OK")
</pallas_src>

<mosaic_0001>
module attributes {stable_mosaic.version = 11 : i64} {
  func.func @_mm_oneshot_kernel(%arg0: memref<48x96xf32, #tpu.memory_space<vmem>>, %arg1: memref<96x64xf32, #tpu.memory_space<vmem>>, %arg2: memref<48x64xf32, #tpu.memory_space<vmem>>) attributes {dimension_semantics = [], scalar_prefetch = 0 : i64, scratch_operands = 0 : i64, tpu.core_type = #tpu.core_type<tc>} {
    %c0 = arith.constant 0 : index
    %c0_0 = arith.constant 0 : index
    %0 = vector.load %arg0[%c0, %c0_0] : memref<48x96xf32, #tpu.memory_space<vmem>>, vector<48x96xf32>
    %c0_1 = arith.constant 0 : index
    %c0_2 = arith.constant 0 : index
    %1 = vector.load %arg1[%c0_1, %c0_2] : memref<96x64xf32, #tpu.memory_space<vmem>>, vector<96x64xf32>
    %cst = arith.constant dense<0.000000e+00> : vector<48x64xf32>
    %2 = tpu.matmul %0, %1, %cst {dimension_numbers = #tpu.dot_dimension_numbers<[1], [0], [0], [1], [0, 0, 1, 1], [], []>} : vector<48x96xf32>, vector<96x64xf32>, vector<48x64xf32> -> vector<48x64xf32>
    %c0_3 = arith.constant 0 : index
    %c0_4 = arith.constant 0 : index
    %3 = vector.load %arg2[%c0_3, %c0_4] : memref<48x64xf32, #tpu.memory_space<vmem>>, vector<48x64xf32>
    tpu.vector_store %arg2[%c0_3, %c0_4], %2 {strides = array<i32>} : memref<48x64xf32, #tpu.memory_space<vmem>>, vector<48x64xf32>,
    return
  }
}

</mosaic_0001>

<llo_original>
// kernel: tpu_custom_call.1
$region0: #{tpu_custom_call.1}
  #allocation0 [shape = 'u32[]', space=smem, size = 0x4, offset = 0x4, fixed_abs, tag = 'smem constant byte address 0x4 - core index']
  #allocation1 [shape = 'u32[72,128]{1,0:T(1,128)}', space=vmem, size = 0x9000, scoped, tag = 'internal scratch']
  %s0 = inlined_call_operand.vmem [shape: f32[48,96], index: 0, kind: input, shape index: {}]
  %s1 = inlined_call_operand.vmem [shape: f32[96,64], index: 1, kind: input, shape index: {}]
  %s2 = inlined_call_operand.hbm [shape: f32[48,64], index: 2, kind: output, shape index: {}]
  %s3 = sld [smem:[#allocation0]]
  $region18: #{tpu_custom_call.1} parent=0
    _
  %s5 = ssub.s32 1, %s3
  %s6 = scalar_select 0, %s5, %s3
  $region1: #{tpu_custom_call.1} parent=0
    #allocation2 [shape = 'u8[24576]{0}', space=vmem, size = 0x6000, scoped, tag = 'output window, operand 0, single buffered']
    #allocation3 [shape = 's32[1]{0}', space=sflag, size = 0x4, scoped, tag = 'scoped memory for tpu_custom_call.1']
    %7 = vsyncpa [#allocation3], 0
    // Predicated region
    $region2: #{tpu_custom_call.1} parent=1 // pred_check
      _
    $region3: #{tpu_custom_call.1} parent=1 // pred_check_branch
      %9 = sbr.rel (0) target = $region5
    $region4: #{tpu_custom_call.1} parent=1 // pred_region
      _
    $region5: #{tpu_custom_call.1} parent=1 // pred_fallthru
      _
    // Predicated region
    $region6: #{tpu_custom_call.1} parent=1 // pred_check
      _
    $region7: #{tpu_custom_call.1} parent=1 // pred_check_branch
      %11 = sbr.rel (0) target = $region9
    $region8: #{tpu_custom_call.1} parent=1 // pred_region
      _
    $region9: #{tpu_custom_call.1} parent=1 // pred_fallthru
      _
    %v12 = vld [vmem:[%s0] sm:$0xff]
    %v13 = vld [vmem:[%s0 + $0x8] sm:$0xff]
    %v14 = vld [vmem:[%s0 + $0x10] sm:$0xff]
    %v15 = vld [vmem:[%s0 + $0x18] sm:$0xff]
    %v16 = vld [vmem:[%s0 + $0x20] sm:$0xff]
    %v17 = vld [vmem:[%s0 + $0x28] sm:$0xff]
    %v18 = vld [vmem:[%s1] sm:$0xff]
    %v19 = vld [vmem:[%s1 + $0x8] sm:$0xff]
    %v20 = vld [vmem:[%s1 + $0x10] sm:$0xff]
    %v21 = vld [vmem:[%s1 + $0x18] sm:$0xff]
    %v22 = vld [vmem:[%s1 + $0x20] sm:$0xff]
    %v23 = vld [vmem:[%s1 + $0x28] sm:$0xff]
    %v24 = vld [vmem:[%s1 + $0x30] sm:$0xff]
    %v25 = vld [vmem:[%s1 + $0x38] sm:$0xff]
    %v26 = vld [vmem:[%s1 + $0x40] sm:$0xff]
    %v27 = vld [vmem:[%s1 + $0x48] sm:$0xff]
    %v28 = vld [vmem:[%s1 + $0x50] sm:$0xff]
    %v29 = vld [vmem:[%s1 + $0x58] sm:$0xff]
    %vm30 = vcmask 785408
    %v32 = vsel %vm30, %v12, 0
    %v35 = vsel %vm30, %v13, 0
    %v38 = vsel %vm30, %v14, 0
    %v41 = vsel %vm30, %v15, 0
    %v44 = vsel %vm30, %v16, 0
    %v47 = vsel %vm30, %v17, 0
    %49 = vmatpush.msra.mxu0 0.0
    %50 = vmatpush.msra.mxu0 0.0
    %51 = vmatpush.msra.mxu0 0.0
    %52 = vmatpush.msra.mxu0 0.0
    %53 = vmatpush.msra.mxu0 %v29
    %54 = vmatpush.msra.mxu0 %v28
    %55 = vmatpush.msra.mxu0 %v27
    %56 = vmatpush.msra.mxu0 %v26
    %57 = vmatpush.msra.mxu0 %v25
    %58 = vmatpush.msra.mxu0 %v24
    %59 = vmatpush.msra.mxu0 %v23
    %60 = vmatpush.msra.mxu0 %v22
    %61 = vmatpush.msra.mxu0 %v21
    %62 = vmatpush.msra.mxu0 %v20
    %63 = vmatpush.msra.mxu0 %v19
    %64 = vmatpush.msra.mxu0 %v18
    %65 = vmatmul.f32.gmra.mxu0 %v32
    %v66 = vpop.f32.mrf.mxu0
    %v67 = vadd.f32 0.0, %v66
    %68 = vmatmul.f32.gmra.mxu0 %v35
    %v69 = vpop.f32.mrf.mxu0
    %v70 = vadd.f32 0.0, %v69
    %71 = vmatmul.f32.gmra.mxu0 %v38
    %v72 = vpop.f32.mrf.mxu0
    %v73 = vadd.f32 0.0, %v72
    %74 = vmatmul.f32.gmra.mxu0 %v41
    %v75 = vpop.f32.mrf.mxu0
    %v76 = vadd.f32 0.0, %v75
    %77 = vmatmul.f32.gmra.mxu0 %v44
    %v78 = vpop.f32.mrf.mxu0
    %v79 = vadd.f32 0.0, %v78
    %80 = vmatmul.f32.gmra.mxu0 %v47
    %v81 = vpop.f32.mrf.mxu0
    %v82 = vadd.f32 0.0, %v81
    %83 = vdwg.mxu0
    %vm84 = vcmask 523264
    %85 = vst.msk [vmem:[#allocation2] sm:$0xff] %vm84, %v67
    %86 = vst.msk [vmem:[#allocation2 + $0x8] sm:$0xff] %vm84, %v70
    %87 = vst.msk [vmem:[#allocation2 + $0x10] sm:$0xff] %vm84, %v73
    %88 = vst.msk [vmem:[#allocation2 + $0x18] sm:$0xff] %vm84, %v76
    %89 = vst.msk [vmem:[#allocation2 + $0x20] sm:$0xff] %vm84, %v79
    %90 = vst.msk [vmem:[#allocation2 + $0x28] sm:$0xff] %vm84, %v82
    // Predicated region
    $region10: #{tpu_custom_call.1} parent=1 // pred_check
      _
    $region11: #{tpu_custom_call.1} parent=1 // pred_check_branch
      %92 = sbr.rel (0) target = $region13
    $region12: #{tpu_custom_call.1} parent=1 // pred_region
      %94 = vsyncadd [#allocation3], 0
      %s95 = sshll.u32 [#allocation2], 4
      %s96 = int_to_ptr.vmem [resolvable:$true] %s95
      %s97 = sshll.u32 %s2, 4
      %s98 = int_to_ptr.hbm [resolvable:$true] %s97
      %103 = dma.vmem_to_hbm [thread:$0]  %s96, 768, %s98, [#allocation3], 128, 128, 8
    $region13: #{tpu_custom_call.1} parent=1 // pred_fallthru
      _
    // Predicated region
    $region14: #{tpu_custom_call.1} parent=1 // pred_check
      _
    $region15: #{tpu_custom_call.1} parent=1 // pred_check_branch
      %105 = sbr.rel (0) target = $region17
    $region16: #{tpu_custom_call.1} parent=1 // pred_region
      %107 = dma.done [#allocation3], 768
    $region17: #{tpu_custom_call.1} parent=1 // pred_fallthru
      _
    %108 = vsyncpa [#allocation3], 1

</llo_original>
